<compile_context>
chip_gen: v5e
topology: v5e:2x2
jax: 0.10.0
libtpu: 0.0.40
codegen_flags: <defaults>
</compile_context>

<pallas_src>
import functools
import math

import jax
import jax.numpy as jnp
from jax.experimental import pallas as pl
from jax.experimental.pallas import tpu as pltpu


def _round_up(x, m):
    return ((x + m - 1) // m) * m


# ---------------------------------------------------------------------------
# Wide-row path: per-row HBM DMA gather, software-pipelined one grid step ahead.
# ---------------------------------------------------------------------------
def _dma_gather_kernel(src_ref, x_hbm, o_ref, buf, sems, *, rows_per_step):
    """Gather rows_per_step rows of x_hbm into the current output block.

    src_ref : SMEM (n_padded,) int32       -- flat source-row ids (scalar prefetch)
    x_hbm   : ANY  (R, C)                  -- flattened patches, stays in HBM
    o_ref   : VMEM (rows_per_step, C)      -- output block for this grid step
    buf     : VMEM (2, rows_per_step, C)   -- double-buffered DMA landing zone
    sems    : DMA semaphore per slot (all row copies of a slot share / count on it)
    """
    outer = pl.program_id(0)            # 'parallel' split across TensorCores
    step = pl.program_id(1)             # 'arbitrary' per-core pipelined axis
    n_inner = pl.num_programs(1)
    chunk0 = outer * n_inner            # first block index owned by this core

    def issue(inner_step, slot):
        base = (chunk0 + inner_step) * rows_per_step

        def body(r, carry):
            s = src_ref[base + r]
            pltpu.make_async_copy(
                x_hbm.at[pl.ds(s, 1), :],
                buf.at[slot, pl.ds(r, 1), :],
                sems.at[slot],
            ).start()
            return carry

        jax.lax.fori_loop(0, rows_per_step, body, 0)

    def wait_slot(slot):
        def body(r, carry):
            # Only the per-copy size matters for the wait; the source slice is a dummy.
            pltpu.make_async_copy(
                x_hbm.at[pl.ds(0, 1), :],
                buf.at[slot, pl.ds(0, 1), :],
                sems.at[slot],
            ).wait()
            return carry

        jax.lax.fori_loop(0, rows_per_step, body, 0)

    slot = step & 1

    @pl.when(step == 0)
    def _():
        issue(step, slot)                    # prime the pipeline for this core's chunk

    @pl.when(step + 1 < n_inner)
    def _():
        issue(step + 1, (step + 1) & 1)      # one-step-ahead prefetch of the next block

    wait_slot(slot)
    o_ref[...] = buf[slot]


def _dma_gather(patches, forward_indexes, num_gather, target_block_bytes):
    """out[g, b, :] = patches[forward_indexes[g, b], b, :] for g < num_gather."""
    T, B, C = patches.shape
    dtype = patches.dtype
    itemsize = jnp.dtype(dtype).itemsize
    row_bytes = C * itemsize

    # Flat row gather on the (T*B, C) view (free reshape, no wrapper transposes):
    #   out_flat[g*B + b] = x_flat[forward_indexes[g, b]*B + b]
    x2d = patches.reshape(T * B, C)
    src = (forward_indexes[:num_gather] * B
           + jnp.arange(B, dtype=jnp.int32)[None, :]).reshape(-1)
    n_rows = num_gather * B

    # ~0.5 MB output blocks amortize the ~0.35us per-step overhead and DMA latency;
    # 4 buffers of that size stay far below v7x's 32 MiB scoped VMEM (64 MiB physical).
    rows_per_step = _round_up(max(8, target_block_bytes // max(1, row_bytes)), 8)
    rows_per_step = min(rows_per_step, 1024)
    rows_per_step = min(rows_per_step, _round_up(n_rows, 8))

    # Leading 'parallel' axis of 2 keeps both v7x TensorCores busy when there is enough
    # work; the pipelined 'arbitrary' axis is sequential per core so the cross-step
    # scratch/semaphore state stays consistent on every chip generation.
    outer = 2 if n_rows >= 2 * rows_per_step else 1
    n_padded = _round_up(n_rows, outer * rows_per_step)
    n_inner = n_padded // (outer * rows_per_step)
    if n_padded != n_rows:
        src = jnp.concatenate(
            [src, jnp.zeros((n_padded - n_rows,), jnp.int32)])   # pad with valid row 0

    # TODO(synk): for very large T*B, DMA per-step index chunks into an SMEM scratch
    # instead of scalar-prefetching the whole flat index array (SMEM pads to next_pow2).

    kernel = functools.partial(_dma_gather_kernel, rows_per_step=rows_per_step)
    out2d = pl.pallas_call(
        kernel,
        out_shape=jax.ShapeDtypeStruct((n_padded, C), dtype),
        grid_spec=pltpu.PrefetchScalarGridSpec(
            num_scalar_prefetch=1,
            grid=(outer, n_inner),
            in_specs=[pl.BlockSpec(memory_space=pl.ANY)],   # raw HBM; rows fetched by DMA
            out_specs=pl.BlockSpec(
                (rows_per_step, C),
                lambda o, i, src_ref: (o * n_inner + i, 0)),
            scratch_shapes=[
                pltpu.VMEM((2, rows_per_step, C), dtype),
                pltpu.SemaphoreType.DMA((2,)),
            ],
        ),
        compiler_params=pltpu.CompilerParams(
            dimension_semantics=("parallel", "arbitrary"),
            vmem_limit_bytes=32 * 1024 * 1024,
        ),
        cost_estimate=pl.CostEstimate(
            flops=0, transcendentals=0,
            bytes_accessed=2 * n_padded * C * itemsize + 4 * n_padded),
    )(src, x2d)

    if n_padded != n_rows:
        out2d = out2d[:n_rows]
    return out2d.reshape(num_gather, B, C)


# ---------------------------------------------------------------------------
# Narrow-row path: rows below ~512 B would leave per-row DMAs descriptor/latency
# bound, so keep the input in VMEM blocks and gather exactly on the VPU.
# ---------------------------------------------------------------------------
def _vpu_gather_kernel(idx_ref, x_ref, o_ref, *, seq_len):
    """idx_ref (1,G,1) int32, x_ref (1,T,C), o_ref (1,G,C): o[g] = x[idx[g]]."""
    idx = idx_ref[0]                                   # (G, 1)
    x = x_ref[0].astype(jnp.float32)                   # (T, C)
    acc = jnp.zeros(o_ref.shape[1:], jnp.float32)      # (G, C)
    # Exact gather as a one-hot select-accumulate (statically unrolled over T):
    # avoids MXU f32-matmul rounding and thousands of 128-byte DMA descriptors.
    for t in range(seq_len):
        acc = acc + jnp.where(idx == t, x[t:t + 1, :], 0.0)
    o_ref[0] = acc.astype(o_ref.dtype)


def _vpu_gather(patches, forward_indexes, num_gather):
    T, B, C = patches.shape
    x_bt = jnp.transpose(patches, (1, 0, 2))                                # (B, T, C); small path -> cheap
    idx = jnp.transpose(forward_indexes[:num_gather], (1, 0))[:, :, None]   # (B, G, 1)
    kernel = functools.partial(_vpu_gather_kernel, seq_len=T)
    out = pl.pallas_call(
        kernel,
        out_shape=jax.ShapeDtypeStruct((B, num_gather, C), patches.dtype),
        grid_spec=pltpu.PrefetchScalarGridSpec(
            num_scalar_prefetch=0,
            grid=(B,),
            in_specs=[pl.BlockSpec((1, num_gather, 1), lambda b: (b, 0, 0)),
                      pl.BlockSpec((1, T, C), lambda b: (b, 0, 0))],
            out_specs=pl.BlockSpec((1, num_gather, C), lambda b: (b, 0, 0)),
        ),
        compiler_params=pltpu.CompilerParams(
            dimension_semantics=("parallel",)),
    )(idx, x_bt)
    return jnp.transpose(out, (1, 0, 2))                                    # (G, B, C)


# ---------------------------------------------------------------------------
# Module-equivalent wrapper.
# ---------------------------------------------------------------------------
def patch_shuffle_scheduled(patches, key, fixed_ratio=None,
                            target_block_bytes=512 * 1024):
    """JAX/Pallas equivalent of PatchShuffleScheduled.forward.

    patches: (T, B, C). Returns (shuffled (remain_T, B, C),
    forward_indexes (T, B) int32, backward_indexes (T, B) int32).
    """
    T, B, C = patches.shape
    key_time, key_perm = jax.random.split(key)

    # Vectorized per-batch permutations: argsort of iid uniforms (no Python loop over B).
    noise = jax.random.uniform(key_perm, (T, B))
    forward_indexes = jnp.argsort(noise, axis=0).astype(jnp.int32)             # (T, B)
    backward_indexes = jnp.argsort(forward_indexes, axis=0).astype(jnp.int32)  # (T, B)

    if fixed_ratio is None:
        # Host draw mirrors torch.rand(1); the output length is data-dependent by spec,
        # so it has to become a concrete Python value here (cannot sit under jit).
        rand_time = float(jax.random.uniform(key_time, ()))
        ratio = math.cos(rand_time * math.pi * 0.5)
    else:
        ratio = float(fixed_ratio)
    remain_t = int(T * (1.0 - ratio))
    remain_t = max(0, min(T, remain_t))

    if remain_t == 0:
        return jnp.zeros((0, B, C), patches.dtype), forward_indexes, backward_indexes

    if fixed_ratio is None:
        # Bucket the gather length to <= 8 sizes: bounded Mosaic recompiles while reading
        # only ~remain_t/T of the input (previously all T rows were gathered).
        bucket = -(-T // 8)
        num_gather = min(T, -(-remain_t // bucket) * bucket)
    else:
        num_gather = remain_t

    row_bytes = C * jnp.dtype(patches.dtype).itemsize
    if row_bytes < 512 and T <= 512:
        shuffled = _vpu_gather(patches, forward_indexes, num_gather)
    else:
        shuffled = _dma_gather(patches, forward_indexes, num_gather, target_block_bytes)
    return shuffled[:remain_t], forward_indexes, backward_indexes


if __name__ == "__main__":
    root = jax.random.PRNGKey(0)
    k_a, k_b, k_c, k_m1, k_m2 = jax.random.split(root, 5)

    def run_and_check(patches, key_mod, fixed_ratio, **kw):
        shuffled, fwd, bwd = patch_shuffle_scheduled(
            patches, key_mod, fixed_ratio=fixed_ratio, **kw)
        shuffled = jax.block_until_ready(shuffled)
        T, B, C = patches.shape
        ref = jnp.take_along_axis(
            patches, jnp.broadcast_to(fwd[:, :, None], (T, B, C)), axis=0
        )[: shuffled.shape[0]]
        assert bool(jnp.array_equal(shuffled, ref)), "gather mismatch"
        iota = jnp.arange(T, dtype=jnp.int32)[:, None]
        assert bool(jnp.all(jnp.sort(fwd, axis=0) == iota)), "not a permutation"
        assert bool(jnp.all(jnp.take_along_axis(fwd, bwd, axis=0) == iota)), "bad inverse"
        return shuffled

    # 1) Narrow rows (C*4 = 128 B) -> exact VPU gather path; fixed and random ratio.
    p_small = jax.random.normal(k_a, (16, 2, 32), dtype=jnp.float32)
    s = run_and_check(p_small, k_m1, 0.75)
    assert s.shape == (4, 2, 32), s.shape
    run_and_check(p_small, k_m2, None)

    # 2) Wide rows (C*4 = 1 KB) -> per-row DMA gather, single output block.
    p_wide = jax.random.normal(k_b, (16, 2, 256), dtype=jnp.float32)
    s = run_and_check(p_wide, k_m1, 0.75)
    assert s.shape == (4, 2, 256), s.shape

    # 3) Wide rows with a small block target so the DMA path runs a (2, 4) grid:
    #    exercises the one-step-ahead prefetch pipeline and the dual-TensorCore split.
    p_pipe = jax.random.normal(k_c, (64, 2, 256), dtype=jnp.float32)
    s = run_and_check(p_pipe, k_m1, 0.5, target_block_bytes=4096)
    assert s.shape == (32, 2, 256), s.shape
    run_and_check(p_pipe, k_m2, None, target_block_bytes=4096)

    print("KERNEL_OK")
</pallas_src>

<mosaic_0001>
module attributes {stable_mosaic.version = 11 : i64} {
  func.func @_vpu_gather_kernel(%arg0: i32, %arg1: memref<1x4x1xi32, #tpu.memory_space<vmem>>, %arg2: memref<1x16x32xf32, #tpu.memory_space<vmem>>, %arg3: memref<1x4x32xf32, #tpu.memory_space<vmem>>) attributes {dimension_semantics = [#tpu.dimension_semantics<parallel>], iteration_bounds = array<i64: 2>, scalar_prefetch = 0 : i64, scratch_operands = 0 : i64, tpu.core_type = #tpu.core_type<tc>, window_params = [{transform_indices = @transform_0, window_bounds = array<i64: 1, 4, 1>}, {transform_indices = @transform_1, window_bounds = array<i64: 1, 16, 32>}, {transform_indices = @transform_2, window_bounds = array<i64: 1, 4, 32>}]} {
    %c0 = arith.constant 0 : index
    %c0_0 = arith.constant 0 : index
    %c0_1 = arith.constant 0 : index
    %0 = vector.load %arg1[%c0, %c0_0, %c0_1] : memref<1x4x1xi32, #tpu.memory_space<vmem>>, vector<1x4x1xi32>
    %1 = vector.shape_cast %0 : vector<1x4x1xi32> to vector<4x1xi32>
    %c0_2 = arith.constant 0 : index
    %c0_3 = arith.constant 0 : index
    %c0_4 = arith.constant 0 : index
    %2 = vector.load %arg2[%c0_2, %c0_3, %c0_4] : memref<1x16x32xf32, #tpu.memory_space<vmem>>, vector<1x16x32xf32>
    %3 = vector.shape_cast %2 : vector<1x16x32xf32> to vector<16x32xf32>
    %cst = arith.constant 0.000000e+00 : f32
    %4 = vector.broadcast %cst : f32 to vector<4x32xf32>
    %c0_i32 = arith.constant 0 : i32
    %5 = vector.broadcast %c0_i32 : i32 to vector<4x1xi32>
    %6 = arith.cmpi eq, %1, %5 : vector<4x1xi32>
    %7 = vector.extract_strided_slice %3 {offsets = [0, 0], sizes = [1, 32], strides = [1, 1]} : vector<16x32xf32> to vector<1x32xf32>
    %cst_5 = arith.constant 0.000000e+00 : f32
    %8 = vector.shape_cast %6 : vector<4x1xi1> to vector<4x1xi1>
    %9 = vector.broadcast %8 : vector<4x1xi1> to vector<4x32xi1>
    %10 = vector.shape_cast %7 : vector<1x32xf32> to vector<1x32xf32>
    %11 = vector.broadcast %10 : vector<1x32xf32> to vector<4x32xf32>
    %12 = vector.broadcast %cst_5 : f32 to vector<4x32xf32>
    %13 = arith.select %9, %11, %12 : vector<4x32xi1>, vector<4x32xf32>
    %14 = arith.addf %4, %13 : vector<4x32xf32>
    %c1_i32 = arith.constant 1 : i32
    %15 = vector.broadcast %c1_i32 : i32 to vector<4x1xi32>
    %16 = arith.cmpi eq, %1, %15 : vector<4x1xi32>
    %17 = vector.extract_strided_slice %3 {offsets = [1, 0], sizes = [1, 32], strides = [1, 1]} : vector<16x32xf32> to vector<1x32xf32>
    %cst_6 = arith.constant 0.000000e+00 : f32
    %18 = vector.shape_cast %16 : vector<4x1xi1> to vector<4x1xi1>
    %19 = vector.broadcast %18 : vector<4x1xi1> to vector<4x32xi1>
    %20 = vector.shape_cast %17 : vector<1x32xf32> to vector<1x32xf32>
    %21 = vector.broadcast %20 : vector<1x32xf32> to vector<4x32xf32>
    %22 = vector.broadcast %cst_6 : f32 to vector<4x32xf32>
    %23 = arith.select %19, %21, %22 : vector<4x32xi1>, vector<4x32xf32>
    %24 = arith.addf %14, %23 : vector<4x32xf32>
    %c2_i32 = arith.constant 2 : i32
    %25 = vector.broadcast %c2_i32 : i32 to vector<4x1xi32>
    %26 = arith.cmpi eq, %1, %25 : vector<4x1xi32>
    %27 = vector.extract_strided_slice %3 {offsets = [2, 0], sizes = [1, 32], strides = [1, 1]} : vector<16x32xf32> to vector<1x32xf32>
    %cst_7 = arith.constant 0.000000e+00 : f32
    %28 = vector.shape_cast %26 : vector<4x1xi1> to vector<4x1xi1>
    %29 = vector.broadcast %28 : vector<4x1xi1> to vector<4x32xi1>
    %30 = vector.shape_cast %27 : vector<1x32xf32> to vector<1x32xf32>
    %31 = vector.broadcast %30 : vector<1x32xf32> to vector<4x32xf32>
    %32 = vector.broadcast %cst_7 : f32 to vector<4x32xf32>
    %33 = arith.select %29, %31, %32 : vector<4x32xi1>, vector<4x32xf32>
    %34 = arith.addf %24, %33 : vector<4x32xf32>
    %c3_i32 = arith.constant 3 : i32
    %35 = vector.broadcast %c3_i32 : i32 to vector<4x1xi32>
    %36 = arith.cmpi eq, %1, %35 : vector<4x1xi32>
    %37 = vector.extract_strided_slice %3 {offsets = [3, 0], sizes = [1, 32], strides = [1, 1]} : vector<16x32xf32> to vector<1x32xf32>
    %cst_8 = arith.constant 0.000000e+00 : f32
    %38 = vector.shape_cast %36 : vector<4x1xi1> to vector<4x1xi1>
    %39 = vector.broadcast %38 : vector<4x1xi1> to vector<4x32xi1>
    %40 = vector.shape_cast %37 : vector<1x32xf32> to vector<1x32xf32>
    %41 = vector.broadcast %40 : vector<1x32xf32> to vector<4x32xf32>
    %42 = vector.broadcast %cst_8 : f32 to vector<4x32xf32>
    %43 = arith.select %39, %41, %42 : vector<4x32xi1>, vector<4x32xf32>
    %44 = arith.addf %34, %43 : vector<4x32xf32>
    %c4_i32 = arith.constant 4 : i32
    %45 = vector.broadcast %c4_i32 : i32 to vector<4x1xi32>
    %46 = arith.cmpi eq, %1, %45 : vector<4x1xi32>
    %47 = vector.extract_strided_slice %3 {offsets = [4, 0], sizes = [1, 32], strides = [1, 1]} : vector<16x32xf32> to vector<1x32xf32>
    %cst_9 = arith.constant 0.000000e+00 : f32
    %48 = vector.shape_cast %46 : vector<4x1xi1> to vector<4x1xi1>
    %49 = vector.broadcast %48 : vector<4x1xi1> to vector<4x32xi1>
    %50 = vector.shape_cast %47 : vector<1x32xf32> to vector<1x32xf32>
    %51 = vector.broadcast %50 : vector<1x32xf32> to vector<4x32xf32>
    %52 = vector.broadcast %cst_9 : f32 to vector<4x32xf32>
    %53 = arith.select %49, %51, %52 : vector<4x32xi1>, vector<4x32xf32>
    %54 = arith.addf %44, %53 : vector<4x32xf32>
    %c5_i32 = arith.constant 5 : i32
    %55 = vector.broadcast %c5_i32 : i32 to vector<4x1xi32>
    %56 = arith.cmpi eq, %1, %55 : vector<4x1xi32>
    %57 = vector.extract_strided_slice %3 {offsets = [5, 0], sizes = [1, 32], strides = [1, 1]} : vector<16x32xf32> to vector<1x32xf32>
    %cst_10 = arith.constant 0.000000e+00 : f32
    %58 = vector.shape_cast %56 : vector<4x1xi1> to vector<4x1xi1>
    %59 = vector.broadcast %58 : vector<4x1xi1> to vector<4x32xi1>
    %60 = vector.shape_cast %57 : vector<1x32xf32> to vector<1x32xf32>
    %61 = vector.broadcast %60 : vector<1x32xf32> to vector<4x32xf32>
    %62 = vector.broadcast %cst_10 : f32 to vector<4x32xf32>
    %63 = arith.select %59, %61, %62 : vector<4x32xi1>, vector<4x32xf32>
    %64 = arith.addf %54, %63 : vector<4x32xf32>
    %c6_i32 = arith.constant 6 : i32
    %65 = vector.broadcast %c6_i32 : i32 to vector<4x1xi32>
    %66 = arith.cmpi eq, %1, %65 : vector<4x1xi32>
    %67 = vector.extract_strided_slice %3 {offsets = [6, 0], sizes = [1, 32], strides = [1, 1]} : vector<16x32xf32> to vector<1x32xf32>
    %cst_11 = arith.constant 0.000000e+00 : f32
    %68 = vector.shape_cast %66 : vector<4x1xi1> to vector<4x1xi1>
    %69 = vector.broadcast %68 : vector<4x1xi1> to vector<4x32xi1>
    %70 = vector.shape_cast %67 : vector<1x32xf32> to vector<1x32xf32>
    %71 = vector.broadcast %70 : vector<1x32xf32> to vector<4x32xf32>
    %72 = vector.broadcast %cst_11 : f32 to vector<4x32xf32>
    %73 = arith.select %69, %71, %72 : vector<4x32xi1>, vector<4x32xf32>
    %74 = arith.addf %64, %73 : vector<4x32xf32>
    %c7_i32 = arith.constant 7 : i32
    %75 = vector.broadcast %c7_i32 : i32 to vector<4x1xi32>
    %76 = arith.cmpi eq, %1, %75 : vector<4x1xi32>
    %77 = vector.extract_strided_slice %3 {offsets = [7, 0], sizes = [1, 32], strides = [1, 1]} : vector<16x32xf32> to vector<1x32xf32>
    %cst_12 = arith.constant 0.000000e+00 : f32
    %78 = vector.shape_cast %76 : vector<4x1xi1> to vector<4x1xi1>
    %79 = vector.broadcast %78 : vector<4x1xi1> to vector<4x32xi1>
    %80 = vector.shape_cast %77 : vector<1x32xf32> to vector<1x32xf32>
    %81 = vector.broadcast %80 : vector<1x32xf32> to vector<4x32xf32>
    %82 = vector.broadcast %cst_12 : f32 to vector<4x32xf32>
    %83 = arith.select %79, %81, %82 : vector<4x32xi1>, vector<4x32xf32>
    %84 = arith.addf %74, %83 : vector<4x32xf32>
    %c8_i32 = arith.constant 8 : i32
    %85 = vector.broadcast %c8_i32 : i32 to vector<4x1xi32>
    %86 = arith.cmpi eq, %1, %85 : vector<4x1xi32>
    %87 = vector.extract_strided_slice %3 {offsets = [8, 0], sizes = [1, 32], strides = [1, 1]} : vector<16x32xf32> to vector<1x32xf32>
    %cst_13 = arith.constant 0.000000e+00 : f32
    %88 = vector.shape_cast %86 : vector<4x1xi1> to vector<4x1xi1>
    %89 = vector.broadcast %88 : vector<4x1xi1> to vector<4x32xi1>
    %90 = vector.shape_cast %87 : vector<1x32xf32> to vector<1x32xf32>
    %91 = vector.broadcast %90 : vector<1x32xf32> to vector<4x32xf32>
    %92 = vector.broadcast %cst_13 : f32 to vector<4x32xf32>
    %93 = arith.select %89, %91, %92 : vector<4x32xi1>, vector<4x32xf32>
    %94 = arith.addf %84, %93 : vector<4x32xf32>
    %c9_i32 = arith.constant 9 : i32
    %95 = vector.broadcast %c9_i32 : i32 to vector<4x1xi32>
    %96 = arith.cmpi eq, %1, %95 : vector<4x1xi32>
    %97 = vector.extract_strided_slice %3 {offsets = [9, 0], sizes = [1, 32], strides = [1, 1]} : vector<16x32xf32> to vector<1x32xf32>
    %cst_14 = arith.constant 0.000000e+00 : f32
    %98 = vector.shape_cast %96 : vector<4x1xi1> to vector<4x1xi1>
    %99 = vector.broadcast %98 : vector<4x1xi1> to vector<4x32xi1>
    %100 = vector.shape_cast %97 : vector<1x32xf32> to vector<1x32xf32>
    %101 = vector.broadcast %100 : vector<1x32xf32> to vector<4x32xf32>
    %102 = vector.broadcast %cst_14 : f32 to vector<4x32xf32>
    %103 = arith.select %99, %101, %102 : vector<4x32xi1>, vector<4x32xf32>
    %104 = arith.addf %94, %103 : vector<4x32xf32>
    %c10_i32 = arith.constant 10 : i32
    %105 = vector.broadcast %c10_i32 : i32 to vector<4x1xi32>
    %106 = arith.cmpi eq, %1, %105 : vector<4x1xi32>
    %107 = vector.extract_strided_slice %3 {offsets = [10, 0], sizes = [1, 32], strides = [1, 1]} : vector<16x32xf32> to vector<1x32xf32>
    %cst_15 = arith.constant 0.000000e+00 : f32
    %108 = vector.shape_cast %106 : vector<4x1xi1> to vector<4x1xi1>
    %109 = vector.broadcast %108 : vector<4x1xi1> to vector<4x32xi1>
    %110 = vector.shape_cast %107 : vector<1x32xf32> to vector<1x32xf32>
    %111 = vector.broadcast %110 : vector<1x32xf32> to vector<4x32xf32>
    %112 = vector.broadcast %cst_15 : f32 to vector<4x32xf32>
    %113 = arith.select %109, %111, %112 : vector<4x32xi1>, vector<4x32xf32>
    %114 = arith.addf %104, %113 : vector<4x32xf32>
    %c11_i32 = arith.constant 11 : i32
    %115 = vector.broadcast %c11_i32 : i32 to vector<4x1xi32>
    %116 = arith.cmpi eq, %1, %115 : vector<4x1xi32>
    %117 = vector.extract_strided_slice %3 {offsets = [11, 0], sizes = [1, 32], strides = [1, 1]} : vector<16x32xf32> to vector<1x32xf32>
    %cst_16 = arith.constant 0.000000e+00 : f32
    %118 = vector.shape_cast %116 : vector<4x1xi1> to vector<4x1xi1>
    %119 = vector.broadcast %118 : vector<4x1xi1> to vector<4x32xi1>
    %120 = vector.shape_cast %117 : vector<1x32xf32> to vector<1x32xf32>
    %121 = vector.broadcast %120 : vector<1x32xf32> to vector<4x32xf32>
    %122 = vector.broadcast %cst_16 : f32 to vector<4x32xf32>
    %123 = arith.select %119, %121, %122 : vector<4x32xi1>, vector<4x32xf32>
    %124 = arith.addf %114, %123 : vector<4x32xf32>
    %c12_i32 = arith.constant 12 : i32
    %125 = vector.broadcast %c12_i32 : i32 to vector<4x1xi32>
    %126 = arith.cmpi eq, %1, %125 : vector<4x1xi32>
    %127 = vector.extract_strided_slice %3 {offsets = [12, 0], sizes = [1, 32], strides = [1, 1]} : vector<16x32xf32> to vector<1x32xf32>
    %cst_17 = arith.constant 0.000000e+00 : f32
    %128 = vector.shape_cast %126 : vector<4x1xi1> to vector<4x1xi1>
    %129 = vector.broadcast %128 : vector<4x1xi1> to vector<4x32xi1>
    %130 = vector.shape_cast %127 : vector<1x32xf32> to vector<1x32xf32>
    %131 = vector.broadcast %130 : vector<1x32xf32> to vector<4x32xf32>
    %132 = vector.broadcast %cst_17 : f32 to vector<4x32xf32>
    %133 = arith.select %129, %131, %132 : vector<4x32xi1>, vector<4x32xf32>
    %134 = arith.addf %124, %133 : vector<4x32xf32>
    %c13_i32 = arith.constant 13 : i32
    %135 = vector.broadcast %c13_i32 : i32 to vector<4x1xi32>
    %136 = arith.cmpi eq, %1, %135 : vector<4x1xi32>
    %137 = vector.extract_strided_slice %3 {offsets = [13, 0], sizes = [1, 32], strides = [1, 1]} : vector<16x32xf32> to vector<1x32xf32>
    %cst_18 = arith.constant 0.000000e+00 : f32
    %138 = vector.shape_cast %136 : vector<4x1xi1> to vector<4x1xi1>
    %139 = vector.broadcast %138 : vector<4x1xi1> to vector<4x32xi1>
    %140 = vector.shape_cast %137 : vector<1x32xf32> to vector<1x32xf32>
    %141 = vector.broadcast %140 : vector<1x32xf32> to vector<4x32xf32>
    %142 = vector.broadcast %cst_18 : f32 to vector<4x32xf32>
    %143 = arith.select %139, %141, %142 : vector<4x32xi1>, vector<4x32xf32>
    %144 = arith.addf %134, %143 : vector<4x32xf32>
    %c14_i32 = arith.constant 14 : i32
    %145 = vector.broadcast %c14_i32 : i32 to vector<4x1xi32>
    %146 = arith.cmpi eq, %1, %145 : vector<4x1xi32>
    %147 = vector.extract_strided_slice %3 {offsets = [14, 0], sizes = [1, 32], strides = [1, 1]} : vector<16x32xf32> to vector<1x32xf32>
    %cst_19 = arith.constant 0.000000e+00 : f32
    %148 = vector.shape_cast %146 : vector<4x1xi1> to vector<4x1xi1>
    %149 = vector.broadcast %148 : vector<4x1xi1> to vector<4x32xi1>
    %150 = vector.shape_cast %147 : vector<1x32xf32> to vector<1x32xf32>
    %151 = vector.broadcast %150 : vector<1x32xf32> to vector<4x32xf32>
    %152 = vector.broadcast %cst_19 : f32 to vector<4x32xf32>
    %153 = arith.select %149, %151, %152 : vector<4x32xi1>, vector<4x32xf32>
    %154 = arith.addf %144, %153 : vector<4x32xf32>
    %c15_i32 = arith.constant 15 : i32
    %155 = vector.broadcast %c15_i32 : i32 to vector<4x1xi32>
    %156 = arith.cmpi eq, %1, %155 : vector<4x1xi32>
    %157 = vector.extract_strided_slice %3 {offsets = [15, 0], sizes = [1, 32], strides = [1, 1]} : vector<16x32xf32> to vector<1x32xf32>
    %cst_20 = arith.constant 0.000000e+00 : f32
    %158 = vector.shape_cast %156 : vector<4x1xi1> to vector<4x1xi1>
    %159 = vector.broadcast %158 : vector<4x1xi1> to vector<4x32xi1>
    %160 = vector.shape_cast %157 : vector<1x32xf32> to vector<1x32xf32>
    %161 = vector.broadcast %160 : vector<1x32xf32> to vector<4x32xf32>
    %162 = vector.broadcast %cst_20 : f32 to vector<4x32xf32>
    %163 = arith.select %159, %161, %162 : vector<4x32xi1>, vector<4x32xf32>
    %164 = arith.addf %154, %163 : vector<4x32xf32>
    %c0_21 = arith.constant 0 : index
    %c0_22 = arith.constant 0 : index
    %c0_23 = arith.constant 0 : index
    %165 = vector.load %arg3[%c0_21, %c0_22, %c0_23] : memref<1x4x32xf32, #tpu.memory_space<vmem>>, vector<1x4x32xf32>
    %166 = vector.shape_cast %165 : vector<1x4x32xf32> to vector<4x32xf32>
    %167 = vector.shape_cast %164 : vector<4x32xf32> to vector<1x4x32xf32>
    tpu.vector_store %arg3[%c0_21, %c0_22, %c0_23], %167 {strides = array<i32>} : memref<1x4x32xf32, #tpu.memory_space<vmem>>, vector<1x4x32xf32>,
    return
  }
  func.func @transform_0(%arg0: i32) -> (i32, i32, i32) {
    %c0_i32 = arith.constant 0 : i32
    %c0_i32_0 = arith.constant 0 : i32
    %c0_i32_1 = arith.constant 0 : i32
    return %arg0, %c0_i32, %c0_i32_0 : i32, i32, i32
  }
  func.func @transform_1(%arg0: i32) -> (i32, i32, i32) {
    %c0_i32 = arith.constant 0 : i32
    %c0_i32_0 = arith.constant 0 : i32
    %c0_i32_1 = arith.constant 0 : i32
    return %arg0, %c0_i32, %c0_i32_0 : i32, i32, i32
  }
  func.func @transform_2(%arg0: i32) -> (i32, i32, i32) {
    %c0_i32 = arith.constant 0 : i32
    %c0_i32_0 = arith.constant 0 : i32
    %c0_i32_1 = arith.constant 0 : i32
    return %arg0, %c0_i32, %c0_i32_0 : i32, i32, i32
  }
}

</mosaic_0001>

<llo_original>
// kernel: tpu_custom_call.1
$region0: #{tpu_custom_call.1}
  #allocation0 [shape = 'u32[]', space=smem, size = 0x4, offset = 0x4, fixed_abs, tag = 'smem constant byte address 0x4 - core index']
  #allocation1 [shape = 'u32[72,128]{1,0:T(1,128)}', space=vmem, size = 0x9000, scoped, tag = 'internal scratch']
  %s0 = inlined_call_operand.vmem [shape: s32[2,4,1], index: 0, kind: input, shape index: {}]
  %s1 = inlined_call_operand.hbm [shape: f32[2,16,32], index: 1, kind: input, shape index: {}]
  %s2 = inlined_call_operand.hbm [shape: f32[2,4,32], index: 2, kind: output, shape index: {}]
  %s3 = sld [smem:[#allocation0]]
  $region45: #{tpu_custom_call.1} parent=0
    _
  %s5 = ssub.s32 1, %s3
  %s6 = scalar_select 0, %s5, %s3
  $region1: #{tpu_custom_call.1} parent=0
    #allocation2 [shape = 'u8[16384]{0}', space=vmem, size = 0x4000, scoped, tag = 'input window, operand 1']
    #allocation3 [shape = 's32[2]{0}', space=sflag, size = 0x8, scoped, tag = 'scoped memory for tpu_custom_call.1']
    #allocation4 [shape = 's32[2]{0}', space=sflag, size = 0x8, scoped, tag = 'scoped memory for tpu_custom_call.1']
    #allocation5 [shape = 'u8[4096]{0}', space=vmem, size = 0x1000, scoped, tag = 'output window, operand 0']
    %7 = vsyncpa [#allocation3], 0
    %s8 = scalar_lea.sflag [#allocation3], 1
    %9 = vsyncpa %s8, 0
    %10 = vsyncpa [#allocation4], 0
    %s11 = scalar_lea.sflag [#allocation4], 1
    %12 = vsyncpa %s11, 0
    loop: start=0, step=1, limit=4
    $region2: #{tpu_custom_call.1} parent=1 // loop_pre_header
      _
    $region3: #{tpu_custom_call.1} parent=1 // loop_header
      %s14 = sphi 0, %s18
      %p15 = scmp.ge.s32.totalorder %s14, 4
      %s24 = sphi 0, %s26
      %s27 = sphi 0, %s24
      %s28 = sphi 0, %s27
      %s44 = sphi 0, %s28
      %s50 = sphi 0, %s52
      %s53 = sphi 0, %s50
      %s54 = sphi 0, %s53
      %s70 = sphi 0, %s54
      %s76 = sphi 0, %s78
      %s79 = sphi 0, %s76
      %s80 = sphi 0, %s79
      %s96 = sphi 0, %s80
    $region4: #{tpu_custom_call.1} parent=1 // loop_header_branch
      %17 = sbr.rel (%p15) target = $region8
    $region5: #{tpu_custom_call.1} parent=1 // loop_body
      %s19 = ssub.s32 %s14, 1
      %s20 = ssub.s32 %s14, 2
      %s21 = sadd.s32 %s14, 1
      %s22 = ssub.s32 %s14, %s21
      %p23 = scmp.eq.s32.totalorder %s22, 0
      %s25 = sadd.s32 %s24, 1
      %s26 = scalar_select %p23, %s24, %s25
      %p29 = pneg %p23
      %p30 = scmp.eq.s32.totalorder %s14, 1
      %p31 = por %p29, %p30
      %p32 = scmp.ne.s32.totalorder %s24, %s27
      %p33 = scmp.eq.s32.totalorder %s14, 0
      %p34 = por %p32, %p33
      %p35 = scmp.ne.s32.totalorder %s24, %s27
      %p36 = scmp.eq.s32.totalorder %s19, 1
      %p37 = por %p35, %p36
      %p38 = scmp.ne.s32.totalorder %s27, %s28
      %p39 = scmp.eq.s32.totalorder %s19, 0
      %p40 = por %p38, %p39
      %p41 = scmp.ne.s32.totalorder %s27, %s28
      %p42 = scmp.eq.s32.totalorder %s20, 1
      %p43 = por %p41, %p42
      %p45 = scmp.ne.s32.totalorder %s28, %s44
      %p46 = scmp.eq.s32.totalorder %s20, 0
      %p47 = por %p45, %p46
      %s48 = ssub.s32 %s14, %s21
      %p49 = scmp.eq.s32.totalorder %s48, 0
      %s51 = sadd.s32 %s50, 1
      %s52 = scalar_select %p49, %s50, %s51
      %p55 = pneg %p49
      %p56 = scmp.eq.s32.totalorder %s14, 1
      %p57 = por %p55, %p56
      %p58 = scmp.ne.s32.totalorder %s50, %s53
      %p59 = scmp.eq.s32.totalorder %s14, 0
      %p60 = por %p58, %p59
      %p61 = scmp.ne.s32.totalorder %s50, %s53
      %p62 = scmp.eq.s32.totalorder %s19, 1
      %p63 = por %p61, %p62
      %p64 = scmp.ne.s32.totalorder %s53, %s54
      %p65 = scmp.eq.s32.totalorder %s19, 0
      %p66 = por %p64, %p65
      %p67 = scmp.ne.s32.totalorder %s53, %s54
      %p68 = scmp.eq.s32.totalorder %s20, 1
      %p69 = por %p67, %p68
      %p71 = scmp.ne.s32.totalorder %s54, %s70
      %p72 = scmp.eq.s32.totalorder %s20, 0
      %p73 = por %p71, %p72
      %s74 = ssub.s32 %s14, %s21
      %p75 = scmp.eq.s32.totalorder %s74, 0
      %s77 = sadd.s32 %s76, 1
      %s78 = scalar_select %p75, %s76, %s77
      %p81 = pneg %p75
      %p82 = scmp.eq.s32.totalorder %s14, 1
      %p83 = por %p81, %p82
      %p84 = scmp.ne.s32.totalorder %s76, %s79
      %p85 = scmp.eq.s32.totalorder %s14, 0
      %p86 = por %p84, %p85
      %p87 = scmp.ne.s32.totalorder %s76, %s79
      %p88 = scmp.eq.s32.totalorder %s19, 1
      %p89 = por %p87, %p88
      %p90 = scmp.ne.s32.totalorder %s79, %s80
      %p91 = scmp.eq.s32.totalorder %s19, 0
      %p92 = por %p90, %p91
      %p93 = scmp.ne.s32.totalorder %s79, %s80
      %p94 = scmp.eq.s32.totalorder %s20, 1
      %p95 = por %p93, %p94
      %p97 = scmp.ne.s32.totalorder %s80, %s96
      %p98 = scmp.eq.s32.totalorder %s20, 0
      %p99 = por %p97, %p98
      %p100 = scmp.le.s32.totalorder 1, %s14
      %p101 = scmp.lt.s32.totalorder %s14, 3
      %p102 = pnand %p100, %p101
      %p103 = pneg %p102
      // Predicated region
      $region9: #{tpu_custom_call.1} parent=5 // pred_check
        _
      $region10: #{tpu_custom_call.1} parent=5 // pred_check_branch
        %105 = sbr.rel (%p102) target = $region12
      $region11: #{tpu_custom_call.1} parent=5 // pred_region
        %s106 = ssub.s32 %s14, 1
      $region12: #{tpu_custom_call.1} parent=5 // pred_fallthru
        _
      %p107 = scmp.lt.s32.totalorder %s14, 2
      // Predicated region
      $region13: #{tpu_custom_call.1} parent=5 // pred_check
        %p108 = pneg %p107
      $region14: #{tpu_custom_call.1} parent=5 // pred_check_branch
        %110 = sbr.rel (%p108) target = $region16
      $region15: #{tpu_custom_call.1} parent=5 // pred_region
        // Predicated region
        $region17: #{tpu_custom_call.1} parent=15 // pred_check
          %p111 = pneg %p34
        $region18: #{tpu_custom_call.1} parent=15 // pred_check_branch
          %113 = sbr.rel (%p111) target = $region20
        $region19: #{tpu_custom_call.1} parent=15 // pred_region
          %p114 = scmp.lt.s32.totalorder %s14, 1
          %s115 = scalar_select %p114, %s14, 1
          %s116 = smul.addr %s115, 4
          %s117 = scalar_lea.vmem %s0, %s116
        $region20: #{tpu_custom_call.1} parent=15 // pred_fallthru
          _
        // Predicated region
        $region21: #{tpu_custom_call.1} parent=15 // pred_check
          %p118 = pneg %p60
        $region22: #{tpu_custom_call.1} parent=15 // pred_check_branch
          %120 = sbr.rel (%p118) target = $region24
        $region23: #{tpu_custom_call.1} parent=15 // pred_region
          %s121 = sand.u32 %s50, 1
          %s122 = scalar_lea.sflag [#allocation3], %s121
          %s123 = sand.u32 %s50, 1
          %s124 = smul.addr %s123, 16
          %s125 = scalar_lea.vmem [#allocation2], %s124
          %127 = vsyncadd %s122, 0
          %s128 = smul.addr %s14, 2
          %s129 = smul.addr %s128, 8
          %s130 = scalar_lea.hbm %s1, %s129
          %s131 = sshll.u32 %s130, 4
          %s132 = int_to_ptr.hbm [resolvable:$true] %s131
          %s133 = sshll.u32 %s125, 4
          %s134 = int_to_ptr.vmem [resolvable:$true] %s133
          %139 = dma.hbm_to_vmem [thread:$0]  %s132, 256, %s134, %s122, 128, 128, 8
        $region24: #{tpu_custom_call.1} parent=15 // pred_fallthru
          _
      $region16: #{tpu_custom_call.1} parent=5 // pred_fallthru
        _
      %p140 = scmp.le.s32.totalorder 1, %s14
      %p141 = scmp.lt.s32.totalorder %s14, 3
      %p142 = pnand %p140, %p141
      %p143 = pneg %p142
      // Predicated region
      $region25: #{tpu_custom_call.1} parent=5 // pred_check
        _
      $region26: #{tpu_custom_call.1} parent=5 // pred_check_branch
        %145 = sbr.rel (%p142) target = $region28
      $region27: #{tpu_custom_call.1} parent=5 // pred_region
        %s146 = ssub.s32 %s14, 1
        %s147 = sand.u32 %s53, 1
        %s148 = scalar_lea.sflag [#allocation3], %s147
        %s149 = sand.u32 %s53, 1
        %s150 = smul.addr %s149, 16
        %s151 = scalar_lea.vmem [#allocation2], %s150
        // Predicated region
        $region29: #{tpu_custom_call.1} parent=27 // pred_check
          %p152 = pneg %p66
        $region30: #{tpu_custom_call.1} parent=27 // pred_check_branch
          %154 = sbr.rel (%p152) target = $region32
        $region31: #{tpu_custom_call.1} parent=27 // pred_region
          %156 = dma.done %s148, 256
        $region32: #{tpu_custom_call.1} parent=27 // pred_fallthru
          _
        %p157 = scmp.lt.s32.totalorder %s19, 1
        %s158 = scalar_select %p157, %s19, 1
        %s159 = smul.addr %s158, 4
        %s160 = scalar_lea.vmem %s0, %s159
        %p161 = pneg %p40
        %p162 = pneg %p37
        %s163 = sand.u32 %s53, 1
        %s164 = scalar_lea.sflag [#allocation3], %s163
        %s165 = sand.u32 %s53, 1
        %s166 = smul.addr %s165, 16
        %s167 = scalar_lea.vmem [#allocation2], %s166
        %p168 = pneg %p66
        %p169 = pneg %p63
        %p170 = pneg %p92
        %p171 = pneg %p89
        %s172 = sand.u32 %s79, 1
        %s173 = scalar_lea.sflag [#allocation4], %s172
        %s174 = sand.u32 %s79, 1
        %s175 = smul.addr %s174, 4
        %s176 = scalar_lea.vmem [#allocation5], %s175
        %p177 = scmp.lt.s32.totalorder %s19, 1
        %s178 = scalar_select %p177, %s19, 1
        %s179 = smul.addr %s178, 4
        %s180 = scalar_lea.vmem %s0, %s179
        %v181 = vld [vmem:[%s180] sm:$0xf]
        %v182 = vld [vmem:[%s151] sm:$0xff]
        %v183 = vld [vmem:[%s151 + $0x8] sm:$0xff]
        %vm184 = vcmp.eq.s32.totalorder %v181, 0
        %v185 = vsel %vm184, 1, 0
        %186 = vset.pattern.permute.xlu0 0
        %187 = vperm.xlu0 %186, %v185
        %v188 = vpop.permute.xlu0 %187
        %vm189 = vcmp.eq.s32.totalorder %v188, 1
        %v190 = vperm.slane %v182, 0
        %v191 = vsel %vm189, %v190, 0.0
        %v192 = vadd.f32 %v191, 0.0
        %vm193 = vcmp.eq.s32.totalorder %v181, 1
        %v194 = vsel %vm193, 1, 0
        %195 = vset.pattern.permute.xlu0 0
        %196 = vperm.xlu0 %195, %v194
        %v197 = vpop.permute.xlu0 %196
        %vm198 = vcmp.eq.s32.totalorder %v197, 1
        %v199 = vperm.slane %v182, 1
        %v200 = vsel %vm198, %v199, 0.0
        %v201 = vadd.f32 %v192, %v200
        %vm202 = vcmp.eq.s32.totalorder %v181, 2
        %v203 = vsel %vm202, 1, 0
        %204 = vset.pattern.permute.xlu0 0
        %205 = vperm.xlu0 %204, %v203
        %v206 = vpop.permute.xlu0 %205
        %vm207 = vcmp.eq.s32.totalorder %v206, 1
        %v208 = vperm.slane %v182, 2
        %v209 = vsel %vm207, %v208, 0.0
        %v210 = vadd.f32 %v201, %v209
        %vm211 = vcmp.eq.s32.totalorder %v181, 3
        %v212 = vsel %vm211, 1, 0
        %213 = vset.pattern.permute.xlu0 0
        %214 = vperm.xlu0 %213, %v212
        %v215 = vpop.permute.xlu0 %214
        %vm216 = vcmp.eq.s32.totalorder %v215, 1
        %v217 = vperm.slane %v182, 3
        %v218 = vsel %vm216, %v217, 0.0
        %v219 = vadd.f32 %v210, %v218
        %vm220 = vcmp.eq.s32.totalorder %v181, 4
        %v221 = vsel %vm220, 1, 0
        %222 = vset.pattern.permute.xlu0 0
        %223 = vperm.xlu0 %222, %v221
        %v224 = vpop.permute.xlu0 %223
        %vm225 = vcmp.eq.s32.totalorder %v224, 1
        %v226 = vperm.slane %v182, 4
        %v227 = vsel %vm225, %v226, 0.0
        %v228 = vadd.f32 %v219, %v227
        %vm229 = vcmp.eq.s32.totalorder %v181, 5
        %v230 = vsel %vm229, 1, 0
        %231 = vset.pattern.permute.xlu0 0
        %232 = vperm.xlu0 %231, %v230
        %v233 = vpop.permute.xlu0 %232
        %vm234 = vcmp.eq.s32.totalorder %v233, 1
        %v235 = vperm.slane %v182, 5
        %v236 = vsel %vm234, %v235, 0.0
        %v237 = vadd.f32 %v228, %v236
        %vm238 = vcmp.eq.s32.totalorder %v181, 6
        %v239 = vsel %vm238, 1, 0
        %240 = vset.pattern.permute.xlu0 0
        %241 = vperm.xlu0 %240, %v239
        %v242 = vpop.permute.xlu0 %241
        %vm243 = vcmp.eq.s32.totalorder %v242, 1
        %v244 = vperm.slane %v182, 6
        %v245 = vsel %vm243, %v244, 0.0
        %v246 = vadd.f32 %v237, %v245
        %vm247 = vcmp.eq.s32.totalorder %v181, 7
        %v248 = vsel %vm247, 1, 0
        %249 = vset.pattern.permute.xlu0 0
        %250 = vperm.xlu0 %249, %v248
        %v251 = vpop.permute.xlu0 %250
        %vm252 = vcmp.eq.s32.totalorder %v251, 1
        %v253 = vperm.slane %v182, 7
        %v254 = vsel %vm252, %v253, 0.0
        %v255 = vadd.f32 %v246, %v254
        %vm256 = vcmp.eq.s32.totalorder %v181, 8
        %v257 = vsel %vm256, 1, 0
        %258 = vset.pattern.permute.xlu0 0
        %259 = vperm.xlu0 %258, %v257
        %v260 = vpop.permute.xlu0 %259
        %vm261 = vcmp.eq.s32.totalorder %v260, 1
        %v262 = vperm.slane %v183, 0
        %v263 = vsel %vm261, %v262, 0.0
        %v264 = vadd.f32 %v255, %v263
        %vm265 = vcmp.eq.s32.totalorder %v181, 9
        %v266 = vsel %vm265, 1, 0
        %267 = vset.pattern.permute.xlu0 0
        %268 = vperm.xlu0 %267, %v266
        %v269 = vpop.permute.xlu0 %268
        %vm270 = vcmp.eq.s32.totalorder %v269, 1
        %v271 = vperm.slane %v183, 1
        %v272 = vsel %vm270, %v271, 0.0
        %v273 = vadd.f32 %v264, %v272
        %vm274 = vcmp.eq.s32.totalorder %v181, 10
        %v275 = vsel %vm274, 1, 0
        %276 = vset.pattern.permute.xlu0 0
        %277 = vperm.xlu0 %276, %v275
        %v278 = vpop.permute.xlu0 %277
        %vm279 = vcmp.eq.s32.totalorder %v278, 1
        %v280 = vperm.slane %v183, 2
        %v281 = vsel %vm279, %v280, 0.0
        %v282 = vadd.f32 %v273, %v281
        %vm283 = vcmp.eq.s32.totalorder %v181, 11
        %v284 = vsel %vm283, 1, 0
        %285 = vset.pattern.permute.xlu0 0
        %286 = vperm.xlu0 %285, %v284
        %v287 = vpop.permute.xlu0 %286
        %vm288 = vcmp.eq.s32.totalorder %v287, 1
        %v289 = vperm.slane %v183, 3
        %v290 = vsel %vm288, %v289, 0.0
        %v291 = vadd.f32 %v282, %v290
        %vm292 = vcmp.eq.s32.totalorder %v181, 12
        %v293 = vsel %vm292, 1, 0
        %294 = vset.pattern.permute.xlu0 0
        %295 = vperm.xlu0 %294, %v293
        %v296 = vpop.permute.xlu0 %295
        %vm297 = vcmp.eq.s32.totalorder %v296, 1
        %v298 = vperm.slane %v183, 4
        %v299 = vsel %vm297, %v298, 0.0
        %v300 = vadd.f32 %v291, %v299
        %vm301 = vcmp.eq.s32.totalorder %v181, 13
        %v302 = vsel %vm301, 1, 0
        %303 = vset.pattern.permute.xlu0 0
        %304 = vperm.xlu0 %303, %v302
        %v305 = vpop.permute.xlu0 %304
        %vm306 = vcmp.eq.s32.totalorder %v305, 1
        %v307 = vperm.slane %v183, 5
        %v308 = vsel %vm306, %v307, 0.0
        %v309 = vadd.f32 %v300, %v308
        %vm310 = vcmp.eq.s32.totalorder %v181, 14
        %v311 = vsel %vm310, 1, 0
        %312 = vset.pattern.permute.xlu0 0
        %313 = vperm.xlu0 %312, %v311
        %v314 = vpop.permute.xlu0 %313
        %vm315 = vcmp.eq.s32.totalorder %v314, 1
        %v316 = vperm.slane %v183, 6
        %v317 = vsel %vm315, %v316, 0.0
        %v318 = vadd.f32 %v309, %v317
        %vm319 = vcmp.eq.s32.totalorder %v181, 15
        %v320 = vsel %vm319, 1, 0
        %321 = vset.pattern.permute.xlu0 0
        %322 = vperm.xlu0 %321, %v320
        %v323 = vpop.permute.xlu0 %322
        %vm324 = vcmp.eq.s32.totalorder %v323, 1
        %v325 = vperm.slane %v183, 7
        %v326 = vsel %vm324, %v325, 0.0
        %v327 = vadd.f32 %v318, %v326
        %vm328 = vcmask 257024
        %329 = vst.msk [vmem:[%s176] sm:$0xf] %vm328, %v327
        %s330 = sand.u32 %s79, 1
        %s331 = scalar_lea.sflag [#allocation4], %s330
        %s332 = sand.u32 %s79, 1
        %s333 = smul.addr %s332, 4
        %s334 = scalar_lea.vmem [#allocation5], %s333
        // Predicated region
        $region33: #{tpu_custom_call.1} parent=27 // pred_check
          %p335 = pneg %p89
        $region34: #{tpu_custom_call.1} parent=27 // pred_check_branch
          %337 = sbr.rel (%p335) target = $region36
        $region35: #{tpu_custom_call.1} parent=27 // pred_region
          %339 = vsyncadd %s331, 0
          %s340 = smul.addr %s19, 4
          %s341 = scalar_lea.hbm %s2, %s340
          %s343 = sshll.u32 %s334, 4
          %s344 = int_to_ptr.vmem [resolvable:$true] %s343
          %s345 = sshll.u32 %s341, 4
          %s346 = int_to_ptr.hbm [resolvable:$true] %s345
          %348 = dma.vmem_to_hbm [thread:$0]  %s344, 64, %s346, %s331
        $region36: #{tpu_custom_call.1} parent=27 // pred_fallthru
          _
      $region28: #{tpu_custom_call.1} parent=5 // pred_fallthru
        _
      %p349 = scmp.le.s32.totalorder 2, %s14
      // Predicated region
      $region37: #{tpu_custom_call.1} parent=5 // pred_check
        %p350 = pneg %p349
      $region38: #{tpu_custom_call.1} parent=5 // pred_check_branch
        %352 = sbr.rel (%p350) target = $region40
      $region39: #{tpu_custom_call.1} parent=5 // pred_region
        %s353 = ssub.s32 %s14, 2
        // Predicated region
        $region41: #{tpu_custom_call.1} parent=39 // pred_check
          %p354 = pneg %p95
        $region42: #{tpu_custom_call.1} parent=39 // pred_check_branch
          %356 = sbr.rel (%p354) target = $region44
        $region43: #{tpu_custom_call.1} parent=39 // pred_region
          %s357 = sand.u32 %s80, 1
          %s358 = scalar_lea.sflag [#allocation4], %s357
          %s359 = sand.u32 %s80, 1
          %s360 = smul.addr %s359, 4
          %s361 = scalar_lea.vmem [#allocation5], %s360
          %363 = dma.done %s358, 64
        $region44: #{tpu_custom_call.1} parent=39 // pred_fallthru
          _
      $region40: #{tpu_custom_call.1} parent=5 // pred_fallthru
        _
    $region6: #{tpu_custom_call.1} parent=1 // loop_footer
      %s18 = sadd.s32 1, %s14
    $region7: #{tpu_custom_call.1} parent=1 // loop_footer_branch
      %13 = sbr.rel target = $region3
    $region8: #{tpu_custom_call.1} parent=1 // loop_exit
      _
    %364 = vsyncpa [#allocation3], 1
    %s365 = scalar_lea.sflag [#allocation3], 1
    %366 = vsyncpa %s365, 1
    %367 = vsyncpa [#allocation4], 1
    %s368 = scalar_lea.sflag [#allocation4], 1
    %369 = vsyncpa %s368, 1

</llo_original>
